<compile_context>
chip_gen: v7x
topology: tpu7x:2x2x1
jax: 0.10.0
libtpu: 0.0.40
codegen_flags: <defaults>
</compile_context>

<pallas_src>
import functools

import numpy as np
import jax
import jax.numpy as jnp
from jax import lax
from jax.experimental import pallas as pl
from jax.experimental.pallas import tpu as pltpu

LANE = 128   # feature axis padded to the 128-lane width
SUB = 8      # row counts bucketed to multiples of 8 sublanes


def _round_up(x, m):
    return ((x + m - 1) // m) * m


def _vmem():
    return pl.BlockSpec(memory_space=pltpu.MemorySpace.VMEM)


# ----------------------------- Pallas kernels -------------------------------

def _leaf_level_kernel(ids_ref, emb_ref, wt_ref, b_ref, out_ref):
    """enc = onehot(ids) @ emb @ W_c.T + b for every node row of a leaf level.

    ids_ref : (R,1)  int32  token id per row, -1 for invalid / padding
    emb_ref : (Vp,Dp) f32   lane-padded embedding table
    wt_ref  : (Dp,Dp) f32   lane-padded W_c.weight.T
    b_ref   : (1,Dp) f32    lane-padded bias
    out_ref : (R,Dp) f32
    """
    R, Dp = out_ref.shape
    Vp = emb_ref.shape[0]
    ids = ids_ref[...]                                        # (R,1) int32
    vcol = lax.broadcasted_iota(jnp.int32, (R, Vp), 1)
    onehot = jnp.where(vcol == ids, 1.0, 0.0).astype(jnp.float32)   # -1 -> zero row
    gathered = jnp.dot(onehot, emb_ref[...], preferred_element_type=jnp.float32)
    out_ref[...] = (jnp.dot(gathered, wt_ref[...], preferred_element_type=jnp.float32)
                    + b_ref[...])


def _level_kernel(ids_ref, cmap_ref, child_ref, emb_ref, wt_ref, b_ref, out_ref):
    """Fused per-level: embed-gather + W_c + child-subtree accumulation.

    cmap_ref[r, c] = row of child_ref whose (already final) encoding is added into
    parent row r for child position c, or -1.  The reference's repeated
    `batch_current += zeros.index_copy(0, children_index[c], tree)` becomes one
    multi-hot MXU matmul.
    """
    R, Dp = out_ref.shape
    Vp = emb_ref.shape[0]
    Rc = child_ref.shape[0]
    C = cmap_ref.shape[1]

    ids = ids_ref[...]                                        # (R,1) int32
    vcol = lax.broadcasted_iota(jnp.int32, (R, Vp), 1)
    onehot = jnp.where(vcol == ids, 1.0, 0.0).astype(jnp.float32)
    gathered = jnp.dot(onehot, emb_ref[...], preferred_element_type=jnp.float32)
    enc = (jnp.dot(gathered, wt_ref[...], preferred_element_type=jnp.float32)
           + b_ref[...])

    ccol = lax.broadcasted_iota(jnp.int32, (R, Rc), 1)
    cmap = cmap_ref[...]                                      # (R, C) int32
    multihot = jnp.zeros((R, Rc), jnp.float32)
    for c in range(C):                                        # C is tiny & static
        idx = cmap[:, c:c + 1]                                # (R,1)
        multihot = multihot + jnp.where(ccol == idx, 1.0, 0.0).astype(jnp.float32)
    out_ref[...] = enc + jnp.dot(multihot, child_ref[...],
                                 preferred_element_type=jnp.float32)


def _scatter_max_kernel(tmap_ref, init_ref, allenc_ref, out_ref):
    """Fused node_list index_copy + torch.max(node_list, 0)[0].

    tmap_ref[b, s] = global row of allenc that node_list entry s scatters into
                     batch row b, or -1.
    init_ref[b, 0] = 0.0 if some node_list entry leaves batch row b at zero (so 0
                     participates in the max, exactly like the reference's zero
                     batch_node rows), else -inf.
    """
    B, Dp = out_ref.shape
    N = allenc_ref.shape[0]
    S = tmap_ref.shape[1]
    col = lax.broadcasted_iota(jnp.int32, (B, N), 1)
    allenc = allenc_ref[...]
    tmap = tmap_ref[...]
    acc = jnp.broadcast_to(init_ref[...], (B, Dp))
    for s in range(S):                                        # S is tiny & static
        idx = tmap[:, s:s + 1]                                # (B,1)
        onehot = jnp.where(col == idx, 1.0, 0.0).astype(jnp.float32)
        g = jnp.dot(onehot, allenc, preferred_element_type=jnp.float32)   # (B,Dp)
        acc = jnp.maximum(acc, jnp.where(idx >= 0, g, -jnp.inf))
    out_ref[...] = acc


# ------------------------- cached kernel builders ---------------------------
# One compiled kernel per shape bucket, reused across calls.

@functools.lru_cache(maxsize=None)
def _leaf_fn(r_pad, v_pad, d_pad):
    del v_pad  # part of the cache key only
    fn = pl.pallas_call(
        _leaf_level_kernel,
        out_shape=jax.ShapeDtypeStruct((r_pad, d_pad), jnp.float32),
        in_specs=[_vmem() for _ in range(4)],
        out_specs=_vmem(),
    )
    return jax.jit(fn)


@functools.lru_cache(maxsize=None)
def _level_fn(r_pad, c_slots, child_r_pad, v_pad, d_pad):
    del c_slots, child_r_pad, v_pad  # part of the cache key only
    fn = pl.pallas_call(
        _level_kernel,
        out_shape=jax.ShapeDtypeStruct((r_pad, d_pad), jnp.float32),
        in_specs=[_vmem() for _ in range(6)],
        out_specs=_vmem(),
    )
    return jax.jit(fn)


@functools.lru_cache(maxsize=None)
def _scatter_max_fn(b_pad, n_slots, n_rows, d_pad):
    del n_slots, n_rows  # part of the cache key only
    fn = pl.pallas_call(
        _scatter_max_kernel,
        out_shape=jax.ShapeDtypeStruct((b_pad, d_pad), jnp.float32),
        in_specs=[_vmem() for _ in range(3)],
        out_specs=_vmem(),
    )
    return jax.jit(fn)


# ----------------------------- module (host glue) ----------------------------

class BatchTreeEncoderPallas:
    def __init__(self, vocab_size, embedding_dim, encode_dim, key):
        # The as-written PyTorch forward requires embedding_dim == encode_dim.
        assert embedding_dim == encode_dim
        k1, k2, k3 = jax.random.split(key, 3)
        emb = jax.random.normal(k1, (vocab_size, embedding_dim), jnp.float32) * 0.1
        bound = 1.0 / np.sqrt(embedding_dim)
        W = jax.random.uniform(k2, (encode_dim, embedding_dim), jnp.float32,
                               -bound, bound)            # nn.Linear weight
        b = jax.random.uniform(k3, (1, encode_dim), jnp.float32, -bound, bound)
        self.embedding, self.W, self.b = emb, W, b
        self.encode_dim = encode_dim
        self.vocab_size = vocab_size
        self.Dp = _round_up(encode_dim, LANE)            # 16 -> 128 lanes
        self.Vp = _round_up(vocab_size, LANE)            # one-hot contraction axis
        # Lane-padded device parameters, built once and reused by every forward().
        self.emb_p = (jnp.zeros((self.Vp, self.Dp), jnp.float32)
                      .at[:vocab_size, :encode_dim].set(emb))
        self.Wt_p = (jnp.zeros((self.Dp, self.Dp), jnp.float32)
                     .at[:encode_dim, :encode_dim].set(W.T))
        self.b_p = (jnp.zeros((1, self.Dp), jnp.float32)
                    .at[:, :encode_dim].set(b))

    # ---- host-side single pass over the tree: builds int32 index tables only ----
    def _build_plan(self, x, bs, bs_pad):
        level_groups = []                                # level -> list of group dicts

        def walk(node, batch_index, level):
            size = len(node)
            if not size:
                return None
            if len(level_groups) <= level:
                level_groups.append([])
            ids = np.full((size,), -1, np.int32)
            children_index, children = [], []
            for i in range(size):
                if node[i][0] != -1:
                    ids[i] = node[i][0]
                    temp = node[i][1:]
                    for j in range(len(temp)):
                        if temp[j][0] != -1:
                            if len(children_index) <= j:
                                children_index.append([i])
                                children.append([temp[j]])
                            else:
                                children_index[j].append(i)
                                children[j].append(temp[j])
                else:
                    batch_index[i] = -1
            grp = {"ids": ids, "size": size, "children": []}
            level_groups[level].append(grp)
            for c in range(len(children)):
                child_bi = [batch_index[i] for i in children_index[c]]
                cg = walk(children[c], child_bi, level + 1)
                if cg is not None:
                    grp["children"].append((cg, children_index[c]))
            grp["b_idx"] = [i for i in batch_index if i != -1]
            return grp

        walk(x, list(range(bs)), 0)

        n_levels = len(level_groups)
        for lvl in level_groups:                         # per-level row offsets
            off = 0
            for g in lvl:
                g["off"] = off
                off += g["size"]
        level_rpad = [_round_up(max(sum(g["size"] for g in lvl), 1), SUB)
                      for lvl in level_groups]

        ids_arrays, cmap_arrays = [], []
        for l in range(n_levels):
            rp = level_rpad[l]
            ids_l = np.full((rp, 1), -1, np.int32)
            for g in level_groups[l]:
                ids_l[g["off"]:g["off"] + g["size"], 0] = g["ids"]
            ids_arrays.append(ids_l)
            if l + 1 < n_levels:
                cmax = max(max(len(g["children"]) for g in level_groups[l]), 1)
                cmap = np.full((rp, cmax), -1, np.int32)
                for g in level_groups[l]:
                    for c, (cg, cidx) in enumerate(g["children"]):
                        for k, i in enumerate(cidx):
                            cmap[g["off"] + i, c] = cg["off"] + k
                cmap_arrays.append(cmap)
            else:
                cmap_arrays.append(None)                 # deepest level: leaf kernel

        # Final node_list scatter + max, as a per-batch-row gather map over the
        # (padded) concatenation of all per-level encodings.
        glo = [0]
        for rp in level_rpad:
            glo.append(glo[-1] + rp)
        n_groups = sum(len(lvl) for lvl in level_groups)
        cover = [[] for _ in range(bs_pad)]
        for l in range(n_levels):
            for g in level_groups[l]:
                # Row k of the group's encoding lands at batch row b_idx[k]
                # (reproduces the reference's index_copy(0, b_idx, batch_current),
                # including the -1-node quirk).
                for k, r in enumerate(g["b_idx"]):
                    cover[r].append(glo[l] + g["off"] + k)
        maxcov = max(1, max(len(c) for c in cover))
        tmap = np.full((bs_pad, maxcov), -1, np.int32)
        for r in range(bs_pad):
            for s, row in enumerate(cover[r]):
                tmap[r, s] = row
        # A node_list entry that does NOT cover batch row r contributes a zero row
        # to the max; include that 0 exactly when such an entry exists.
        init = np.where(np.array([len(c) for c in cover]) < n_groups,
                        0.0, -np.inf).astype(np.float32).reshape(bs_pad, 1)

        return level_rpad, ids_arrays, cmap_arrays, tmap, init

    def forward(self, x, bs):
        bs_pad = _round_up(max(bs, 1), SUB)
        level_rpad, ids_arrays, cmap_arrays, tmap, init = \
            self._build_plan(x, bs, bs_pad)
        n_levels = len(level_rpad)

        # Bottom-up over levels: ONE fused kernel per level does the embed gather,
        # the (collapsed) W_c, and the child-subtree accumulation for every group
        # at that level.
        enc = [None] * n_levels
        for l in range(n_levels - 1, -1, -1):
            rp = level_rpad[l]
            ids_dev = jnp.asarray(ids_arrays[l])
            if cmap_arrays[l] is None:                   # deepest level: no children
                enc[l] = _leaf_fn(rp, self.Vp, self.Dp)(
                    ids_dev, self.emb_p, self.Wt_p, self.b_p)
            else:
                cmap = cmap_arrays[l]
                enc[l] = _level_fn(rp, cmap.shape[1], level_rpad[l + 1],
                                   self.Vp, self.Dp)(
                    ids_dev, jnp.asarray(cmap), enc[l + 1],
                    self.emb_p, self.Wt_p, self.b_p)

        allenc = enc[0] if n_levels == 1 else jnp.concatenate(enc, axis=0)
        out_p = _scatter_max_fn(bs_pad, tmap.shape[1], allenc.shape[0], self.Dp)(
            jnp.asarray(tmap), jnp.asarray(init), allenc)
        return out_p[:bs, :self.encode_dim]              # strip lane/row padding


# ----------------------------- numpy reference --------------------------------

def ref_forward(x, bs, emb, W, b, encode_dim):
    node_list = []

    def traverse(node, batch_index):
        size = len(node)
        if not size:
            return None
        batch_current = np.zeros((size, encode_dim), np.float32)
        index, children_index = [], []
        current_node, children = [], []
        for i in range(size):
            if node[i][0] != -1:
                index.append(i)
                current_node.append(node[i][0])
                temp = node[i][1:]
                for j in range(len(temp)):
                    if temp[j][0] != -1:
                        if len(children_index) <= j:
                            children_index.append([i])
                            children.append([temp[j]])
                        else:
                            children_index[j].append(i)
                            children[j].append(temp[j])
            else:
                batch_index[i] = -1
            new = batch_current.copy()
            if index:
                new[np.asarray(index)] = emb[np.asarray(current_node)]
            batch_current = new @ W.T + b
        for c in range(len(children)):
            zeros = np.zeros((size, encode_dim), np.float32)
            sub = traverse(children[c], [batch_index[i] for i in children_index[c]])
            if sub is not None:
                zeros[np.asarray(children_index[c])] = sub
                batch_current = batch_current + zeros
        b_idx = [i for i in batch_index if i != -1]
        bn = np.zeros((bs, encode_dim), np.float32)
        if b_idx:
            bn[np.asarray(b_idx)] = batch_current[:len(b_idx)]
        node_list.append(bn)
        return batch_current

    traverse(x, list(range(bs)))
    return np.max(np.stack(node_list), axis=0)


# ----------------------------------- main -------------------------------------

if __name__ == "__main__":
    vocab_size = 32
    embedding_dim = encode_dim = 16
    bs = 4

    encoder = BatchTreeEncoderPallas(vocab_size, embedding_dim, encode_dim,
                                     jax.random.PRNGKey(0))

    # batch of 4 small trees: node = [token_id, child_node, child_node, ...]
    x = [
        [3, [5, [7]], [2]],
        [1, [4], [6, [8], [9]]],
        [10, [11, [12, [13]]]],
        [2],
    ]

    out = jax.block_until_ready(encoder.forward(x, bs))

    ref = ref_forward(x, bs, np.asarray(encoder.embedding), np.asarray(encoder.W),
                      np.asarray(encoder.b), encode_dim)
    np.testing.assert_allclose(np.asarray(out), ref, rtol=1e-3, atol=1e-3)
    print("KERNEL_OK")
</pallas_src>

<mosaic_0001>
module attributes {stable_mosaic.version = 11 : i64} {
  func.func @_leaf_level_kernel(%arg0: memref<8x1xi32, #tpu.memory_space<vmem>>, %arg1: memref<128x128xf32, #tpu.memory_space<vmem>>, %arg2: memref<128x128xf32, #tpu.memory_space<vmem>>, %arg3: memref<1x128xf32, #tpu.memory_space<vmem>>, %arg4: memref<8x128xf32, #tpu.memory_space<vmem>>) attributes {dimension_semantics = [], scalar_prefetch = 0 : i64, scratch_operands = 0 : i64, tpu.core_type = #tpu.core_type<tc>} {
    %c0 = arith.constant 0 : index
    %c0_0 = arith.constant 0 : index
    %0 = vector.load %arg0[%c0, %c0_0] : memref<8x1xi32, #tpu.memory_space<vmem>>, vector<8x1xi32>
    %1 = tpu.iota {dimensions = array<i32: 1>} : vector<8x128xi32>
    %2 = vector.broadcast %0 : vector<8x1xi32> to vector<8x128xi32>
    %3 = arith.cmpi eq, %1, %2 : vector<8x128xi32>
    %cst = arith.constant 1.000000e+00 : f32
    %cst_1 = arith.constant 0.000000e+00 : f32
    %4 = vector.broadcast %cst : f32 to vector<8x128xf32>
    %5 = vector.broadcast %cst_1 : f32 to vector<8x128xf32>
    %6 = arith.select %3, %4, %5 : vector<8x128xi1>, vector<8x128xf32>
    %c0_2 = arith.constant 0 : index
    %c0_3 = arith.constant 0 : index
    %7 = vector.load %arg1[%c0_2, %c0_3] : memref<128x128xf32, #tpu.memory_space<vmem>>, vector<128x128xf32>
    %cst_4 = arith.constant dense<0.000000e+00> : vector<8x128xf32>
    %8 = tpu.matmul %6, %7, %cst_4 {dimension_numbers = #tpu.dot_dimension_numbers<[1], [0], [0], [1], [0, 0, 1, 1], [], []>} : vector<8x128xf32>, vector<128x128xf32>, vector<8x128xf32> -> vector<8x128xf32>
    %c0_5 = arith.constant 0 : index
    %c0_6 = arith.constant 0 : index
    %9 = vector.load %arg2[%c0_5, %c0_6] : memref<128x128xf32, #tpu.memory_space<vmem>>, vector<128x128xf32>
    %cst_7 = arith.constant dense<0.000000e+00> : vector<8x128xf32>
    %10 = tpu.matmul %8, %9, %cst_7 {dimension_numbers = #tpu.dot_dimension_numbers<[1], [0], [0], [1], [0, 0, 1, 1], [], []>} : vector<8x128xf32>, vector<128x128xf32>, vector<8x128xf32> -> vector<8x128xf32>
    %c0_8 = arith.constant 0 : index
    %c0_9 = arith.constant 0 : index
    %11 = vector.load %arg3[%c0_8, %c0_9] : memref<1x128xf32, #tpu.memory_space<vmem>>, vector<1x128xf32>
    %12 = vector.broadcast %11 : vector<1x128xf32> to vector<8x128xf32>
    %13 = arith.addf %10, %12 : vector<8x128xf32>
    %c0_10 = arith.constant 0 : index
    %c0_11 = arith.constant 0 : index
    %14 = vector.load %arg4[%c0_10, %c0_11] : memref<8x128xf32, #tpu.memory_space<vmem>>, vector<8x128xf32>
    tpu.vector_store %arg4[%c0_10, %c0_11], %13 {strides = array<i32>} : memref<8x128xf32, #tpu.memory_space<vmem>>, vector<8x128xf32>,
    return
  }
}

</mosaic_0001>

<llo_original>
// kernel: tpu_custom_call.1
$region0: #{tpu_custom_call.1}
  #allocation0 [shape = 'u32[]', space=smem, size = 0x4, offset = 0x4, fixed_abs, tag = 'smem constant byte address 0x4 - core index']
  #allocation1 [shape = 'u32[144,128]{1,0:T(1,128)}', space=vmem, size = 0x12000, scoped, tag = 'internal scratch']
  %s0 = inlined_call_operand.vmem [shape: s32[8,1], index: 0, kind: input, shape index: {}]
  %s1 = inlined_call_operand.hbm [shape: f32[128,128], index: 1, kind: input, shape index: {}]
  %s2 = inlined_call_operand.hbm [shape: f32[128,128], index: 2, kind: input, shape index: {}]
  %s3 = inlined_call_operand.vmem [shape: f32[1,128], index: 3, kind: input, shape index: {}]
  %s4 = inlined_call_operand.hbm [shape: f32[8,128], index: 4, kind: output, shape index: {}]
  %s5 = sld [smem:[#allocation0]]
  $region34: #{tpu_custom_call.1} parent=0
    _
  %s7 = ssub.s32 1, %s5
  %s8 = scalar_select 0, %s7, %s5
  $region1: #{tpu_custom_call.1} parent=0
    #allocation2 [shape = 'u8[65536]{0}', space=vmem, size = 0x10000, scoped, tag = 'input window, operand 1, single buffered']
    #allocation3 [shape = 's32[1]{0}', space=sflag, size = 0x4, scoped, tag = 'scoped memory for tpu_custom_call.1']
    #allocation4 [shape = 's32[1]{0}', space=sflag, size = 0x4, scoped, tag = 'scoped memory for tpu_custom_call.1']
    #allocation5 [shape = 'u8[65536]{0}', space=vmem, size = 0x10000, scoped, tag = 'input window, operand 2, single buffered']
    #allocation6 [shape = 's32[1]{0}', space=sflag, size = 0x4, scoped, tag = 'scoped memory for tpu_custom_call.1']
    #allocation7 [shape = 'u8[4096]{0}', space=vmem, size = 0x1000, scoped, tag = 'output window, operand 0, single buffered']
    %9 = vsyncpa [#allocation3], 0
    %10 = vsyncpa [#allocation6], 0
    %11 = vsyncpa [#allocation4], 0
    // Predicated region
    $region2: #{tpu_custom_call.1} parent=1 // pred_check
      _
    $region3: #{tpu_custom_call.1} parent=1 // pred_check_branch
      %13 = sbr.rel (0) target = $region5
    $region4: #{tpu_custom_call.1} parent=1 // pred_region
      _
    $region5: #{tpu_custom_call.1} parent=1 // pred_fallthru
      _
    // Predicated region
    $region6: #{tpu_custom_call.1} parent=1 // pred_check
      _
    $region7: #{tpu_custom_call.1} parent=1 // pred_check_branch
      %15 = sbr.rel (0) target = $region9
    $region8: #{tpu_custom_call.1} parent=1 // pred_region
      %s17 = ssub.s32 2048, 2048
      %18 = vsyncadd [#allocation3], %s17
      %s19 = sshll.u32 [#allocation2], 4
      %s20 = int_to_ptr.vmem [resolvable:$true] %s19
      %25 = dma.hbm_to_vmem [thread:$0]  %s1, 2048, %s20, [#allocation3], 128, 128, 8
    $region9: #{tpu_custom_call.1} parent=1 // pred_fallthru
      _
    // Predicated region
    $region10: #{tpu_custom_call.1} parent=1 // pred_check
      _
    $region11: #{tpu_custom_call.1} parent=1 // pred_check_branch
      %27 = sbr.rel (0) target = $region13
    $region12: #{tpu_custom_call.1} parent=1 // pred_region
      %s29 = ssub.s32 2048, 2048
      %30 = vsyncadd [#allocation6], %s29
      %s31 = sshll.u32 [#allocation5], 4
      %s32 = int_to_ptr.vmem [resolvable:$true] %s31
      %37 = dma.hbm_to_vmem [thread:$0]  %s2, 2048, %s32, [#allocation6], 128, 128, 8
    $region13: #{tpu_custom_call.1} parent=1 // pred_fallthru
      _
    // Predicated region
    $region14: #{tpu_custom_call.1} parent=1 // pred_check
      _
    $region15: #{tpu_custom_call.1} parent=1 // pred_check_branch
      %39 = sbr.rel (0) target = $region17
    $region16: #{tpu_custom_call.1} parent=1 // pred_region
      _
    $region17: #{tpu_custom_call.1} parent=1 // pred_fallthru
      _
    // Predicated region
    $region18: #{tpu_custom_call.1} parent=1 // pred_check
      _
    $region19: #{tpu_custom_call.1} parent=1 // pred_check_branch
      %41 = sbr.rel (0) target = $region21
    $region20: #{tpu_custom_call.1} parent=1 // pred_region
      %42 = dma.done [#allocation3], 2048
    $region21: #{tpu_custom_call.1} parent=1 // pred_fallthru
      _
    // Predicated region
    $region22: #{tpu_custom_call.1} parent=1 // pred_check
      _
    $region23: #{tpu_custom_call.1} parent=1 // pred_check_branch
      %44 = sbr.rel (0) target = $region25
    $region24: #{tpu_custom_call.1} parent=1 // pred_region
      %45 = dma.done [#allocation6], 2048
    $region25: #{tpu_custom_call.1} parent=1 // pred_fallthru
      _
    %v46 = vld [vmem:[%s0] sm:$0xff]
    %v47 = vlaneseq
    %v48 = vand.u32 %v47, 127
    %49 = vset.pattern.permute.xlu0 0
    %50 = vperm.xlu0 %49, %v46
    %v51 = vpop.permute.xlu0 %50
    %vm52 = vcmp.eq.s32.totalorder %v48, %v51
    %v53 = vsel %vm52, 1.0, 0.0
    %v54 = vld [vmem:[#allocation2] sm:$0xff]
    %v55 = vld [vmem:[#allocation2 + $0x8] sm:$0xff]
    %v56 = vld [vmem:[#allocation2 + $0x10] sm:$0xff]
    %v57 = vld [vmem:[#allocation2 + $0x18] sm:$0xff]
    %v58 = vld [vmem:[#allocation2 + $0x20] sm:$0xff]
    %v59 = vld [vmem:[#allocation2 + $0x28] sm:$0xff]
    %v60 = vld [vmem:[#allocation2 + $0x30] sm:$0xff]
    %v61 = vld [vmem:[#allocation2 + $0x38] sm:$0xff]
    %v62 = vld [vmem:[#allocation2 + $0x40] sm:$0xff]
    %v63 = vld [vmem:[#allocation2 + $0x48] sm:$0xff]
    %v64 = vld [vmem:[#allocation2 + $0x50] sm:$0xff]
    %v65 = vld [vmem:[#allocation2 + $0x58] sm:$0xff]
    %v66 = vld [vmem:[#allocation2 + $0x60] sm:$0xff]
    %v67 = vld [vmem:[#allocation2 + $0x68] sm:$0xff]
    %v68 = vld [vmem:[#allocation2 + $0x70] sm:$0xff]
    %v69 = vld [vmem:[#allocation2 + $0x78] sm:$0xff]
    %70 = vmatprep.subr.mxu0 0.0
    %71 = vmatpush1.msra.mxu0 %v54
    %72 = vmatprep.subr.mxu0 0.0
    %73 = vmatpush1.msra.mxu0 %v55
    %74 = vmatprep.subr.mxu0 0.0
    %75 = vmatpush1.msra.mxu0 %v56
    %76 = vmatprep.subr.mxu0 0.0
    %77 = vmatpush1.msra.mxu0 %v57
    %78 = vmatprep.subr.mxu0 0.0
    %79 = vmatpush1.msra.mxu0 %v58
    %80 = vmatprep.subr.mxu0 0.0
    %81 = vmatpush1.msra.mxu0 %v59
    %82 = vmatprep.subr.mxu0 0.0
    %83 = vmatpush1.msra.mxu0 %v60
    %84 = vmatprep.subr.mxu0 0.0
    %85 = vmatpush1.msra.mxu0 %v61
    %86 = vmatprep.subr.mxu0 0.0
    %87 = vmatpush1.msra.mxu0 %v62
    %88 = vmatprep.subr.mxu0 0.0
    %89 = vmatpush1.msra.mxu0 %v63
    %90 = vmatprep.subr.mxu0 0.0
    %91 = vmatpush1.msra.mxu0 %v64
    %92 = vmatprep.subr.mxu0 0.0
    %93 = vmatpush1.msra.mxu0 %v65
    %94 = vmatprep.subr.mxu0 0.0
    %95 = vmatpush1.msra.mxu0 %v66
    %96 = vmatprep.subr.mxu0 0.0
    %97 = vmatpush1.msra.mxu0 %v67
    %98 = vmatprep.subr.mxu0 0.0
    %99 = vmatpush1.msra.mxu0 %v68
    %100 = vmatprep.subr.mxu0 0.0
    %101 = vmatpush1.msra.mxu0 %v69
    %102 = vmatprep.subr.mxu0 0.0
    %103 = vmatpush1.msra.mxu0 0.0
    %104 = vmatprep.subr.mxu0 0.0
    %105 = vmatpush1.msra.mxu0 0.0
    %106 = vmatprep.subr.mxu0 0.0
    %107 = vmatpush1.msra.mxu0 0.0
    %108 = vmatprep.subr.mxu0 0.0
    %109 = vmatpush1.msra.mxu0 0.0
    %110 = vmatprep.subr.mxu0 0.0
    %111 = vmatpush1.msra.mxu0 0.0
    %112 = vmatprep.subr.mxu0 0.0
    %113 = vmatpush1.msra.mxu0 0.0
    %114 = vmatprep.subr.mxu0 0.0
    %115 = vmatpush1.msra.mxu0 0.0
    %116 = vmatprep.subr.mxu0 0.0
    %117 = vmatpush1.msra.mxu0 0.0
    %118 = vmatprep.subr.mxu0 0.0
    %119 = vmatpush1.msra.mxu0 0.0
    %120 = vmatprep.subr.mxu0 0.0
    %121 = vmatpush1.msra.mxu0 0.0
    %122 = vmatprep.subr.mxu0 0.0
    %123 = vmatpush1.msra.mxu0 0.0
    %124 = vmatprep.subr.mxu0 0.0
    %125 = vmatpush1.msra.mxu0 0.0
    %126 = vmatprep.subr.mxu0 0.0
    %127 = vmatpush1.msra.mxu0 0.0
    %128 = vmatprep.subr.mxu0 0.0
    %129 = vmatpush1.msra.mxu0 0.0
    %130 = vmatprep.subr.mxu0 0.0
    %131 = vmatpush1.msra.mxu0 0.0
    %132 = vmatprep.subr.mxu0 0.0
    %133 = vmatpush1.msra.mxu0 0.0
    %134 = vmatprep.mubr.f32.mxu0 0.0
    %135 = vmatmul.mubr.f32.gmra.mrb[0].mxu0 %v53
    %v136 = vpop.f32.mrb[0].mxu0
    %v137 = vadd.f32 0.0, %v136
    %v138 = vpop.f32.mrb[0].mxu0
    %139 = vdwg.mxu0
    %v140 = vld [vmem:[#allocation5] sm:$0xff]
    %v141 = vld [vmem:[#allocation5 + $0x8] sm:$0xff]
    %v142 = vld [vmem:[#allocation5 + $0x10] sm:$0xff]
    %v143 = vld [vmem:[#allocation5 + $0x18] sm:$0xff]
    %v144 = vld [vmem:[#allocation5 + $0x20] sm:$0xff]
    %v145 = vld [vmem:[#allocation5 + $0x28] sm:$0xff]
    %v146 = vld [vmem:[#allocation5 + $0x30] sm:$0xff]
    %v147 = vld [vmem:[#allocation5 + $0x38] sm:$0xff]
    %v148 = vld [vmem:[#allocation5 + $0x40] sm:$0xff]
    %v149 = vld [vmem:[#allocation5 + $0x48] sm:$0xff]
    %v150 = vld [vmem:[#allocation5 + $0x50] sm:$0xff]
    %v151 = vld [vmem:[#allocation5 + $0x58] sm:$0xff]
    %v152 = vld [vmem:[#allocation5 + $0x60] sm:$0xff]
    %v153 = vld [vmem:[#allocation5 + $0x68] sm:$0xff]
    %v154 = vld [vmem:[#allocation5 + $0x70] sm:$0xff]
    %v155 = vld [vmem:[#allocation5 + $0x78] sm:$0xff]
    %v156 = vld [vmem:[%s3] sm:$0x1]
    %v158 = vlaneseq
    %v159 = vshrl.u32 %v158, 7
    %v160 = vsub.s32 0, %v159
    %v161 = vrot.slane %v156, %v160
    %163 = vmatprep.subr.mxu0 0.0
    %164 = vmatpush1.msra.mxu0 %v140
    %165 = vmatprep.subr.mxu0 0.0
    %166 = vmatpush1.msra.mxu0 %v141
    %167 = vmatprep.subr.mxu0 0.0
    %168 = vmatpush1.msra.mxu0 %v142
    %169 = vmatprep.subr.mxu0 0.0
    %170 = vmatpush1.msra.mxu0 %v143
    %171 = vmatprep.subr.mxu0 0.0
    %172 = vmatpush1.msra.mxu0 %v144
    %173 = vmatprep.subr.mxu0 0.0
    %174 = vmatpush1.msra.mxu0 %v145
    %175 = vmatprep.subr.mxu0 0.0
    %176 = vmatpush1.msra.mxu0 %v146
    %177 = vmatprep.subr.mxu0 0.0
    %178 = vmatpush1.msra.mxu0 %v147
    %179 = vmatprep.subr.mxu0 0.0
    %180 = vmatpush1.msra.mxu0 %v148
    %181 = vmatprep.subr.mxu0 0.0
    %182 = vmatpush1.msra.mxu0 %v149
    %183 = vmatprep.subr.mxu0 0.0
    %184 = vmatpush1.msra.mxu0 %v150
    %185 = vmatprep.subr.mxu0 0.0
    %186 = vmatpush1.msra.mxu0 %v151
    %187 = vmatprep.subr.mxu0 0.0
    %188 = vmatpush1.msra.mxu0 %v152
    %189 = vmatprep.subr.mxu0 0.0
    %190 = vmatpush1.msra.mxu0 %v153
    %191 = vmatprep.subr.mxu0 0.0
    %192 = vmatpush1.msra.mxu0 %v154
    %193 = vmatprep.subr.mxu0 0.0
    %194 = vmatpush1.msra.mxu0 %v155
    %195 = vmatprep.subr.mxu0 0.0
    %196 = vmatpush1.msra.mxu0 0.0
    %197 = vmatprep.subr.mxu0 0.0
    %198 = vmatpush1.msra.mxu0 0.0
    %199 = vmatprep.subr.mxu0 0.0
    %200 = vmatpush1.msra.mxu0 0.0
    %201 = vmatprep.subr.mxu0 0.0
    %202 = vmatpush1.msra.mxu0 0.0
    %203 = vmatprep.subr.mxu0 0.0
    %204 = vmatpush1.msra.mxu0 0.0
    %205 = vmatprep.subr.mxu0 0.0
    %206 = vmatpush1.msra.mxu0 0.0
    %207 = vmatprep.subr.mxu0 0.0
    %208 = vmatpush1.msra.mxu0 0.0
    %209 = vmatprep.subr.mxu0 0.0
    %210 = vmatpush1.msra.mxu0 0.0
    %211 = vmatprep.subr.mxu0 0.0
    %212 = vmatpush1.msra.mxu0 0.0
    %213 = vmatprep.subr.mxu0 0.0
    %214 = vmatpush1.msra.mxu0 0.0
    %215 = vmatprep.subr.mxu0 0.0
    %216 = vmatpush1.msra.mxu0 0.0
    %217 = vmatprep.subr.mxu0 0.0
    %218 = vmatpush1.msra.mxu0 0.0
    %219 = vmatprep.subr.mxu0 0.0
    %220 = vmatpush1.msra.mxu0 0.0
    %221 = vmatprep.subr.mxu0 0.0
    %222 = vmatpush1.msra.mxu0 0.0
    %223 = vmatprep.subr.mxu0 0.0
    %224 = vmatpush1.msra.mxu0 0.0
    %225 = vmatprep.subr.mxu0 0.0
    %226 = vmatpush1.msra.mxu0 0.0
    %227 = vmatprep.mubr.f32.mxu0 0.0
    %228 = vmatmul.mubr.f32.gmra.mrb[0].mxu0 %v137
    %v229 = vpop.f32.mrb[0].mxu0
    %v230 = vadd.f32 %v161, %v229
    %v231 = vpop.f32.mrb[0].mxu0
    %232 = vdwg.mxu0
    %233 = vst [vmem:[#allocation7] sm:$0xff] %v230
    // Predicated region
    $region26: #{tpu_custom_call.1} parent=1 // pred_check
      _
    $region27: #{tpu_custom_call.1} parent=1 // pred_check_branch
      %235 = sbr.rel (0) target = $region29
    $region28: #{tpu_custom_call.1} parent=1 // pred_region
      %s237 = ssub.s32 128, 128
      %238 = vsyncadd [#allocation4], %s237
      %s240 = sshll.u32 [#allocation7], 4
      %s241 = int_to_ptr.vmem [resolvable:$true] %s240
      %243 = dma.vmem_to_hbm [thread:$0]  %s241, 128, %s4, [#allocation4]
    $region29: #{tpu_custom_call.1} parent=1 // pred_fallthru
      _
    // Predicated region
    $region30: #{tpu_custom_call.1} parent=1 // pred_check
      _
    $region31: #{tpu_custom_call.1} parent=1 // pred_check_branch
      %245 = sbr.rel (0) target = $region33
    $region32: #{tpu_custom_call.1} parent=1 // pred_region
      %246 = dma.done [#allocation4], 128
    $region33: #{tpu_custom_call.1} parent=1 // pred_fallthru
      _
    %247 = vsyncpa [#allocation3], 1
    %248 = vsyncpa [#allocation6], 1
    %249 = vsyncpa [#allocation4], 1

</llo_original>
